<compile_context>
chip_gen: v7x
topology: tpu7x:2x2x1
jax: 0.10.0
libtpu: 0.0.40
codegen_flags: <defaults>
</compile_context>

<pallas_src>
import functools

import jax
import jax.numpy as jnp
from jax.experimental import pallas as pl
from jax.experimental.pallas import tpu as pltpu

_LANES = 128
_SUBLANES = 8

# Byte budget for VMEM-resident data per pipeline step: 2 inputs x 2 pipeline
# buffers in the native dtype plus a generous allowance (~6 f32 block-sized
# temporaries) for the elementwise chain.  Comfortably under v7x's 64 MiB
# physical VMEM (v5e/v6e have 128 MiB).
_VMEM_DATA_BUDGET = 46 << 20


def _round_up(x, m):
    return (x + m - 1) // m * m


def _round_down(x, m):
    return (x // m) * m


def _tensorcores_per_device():
    """Best-effort TensorCore count per device (megacore split factor)."""
    try:
        kind = jax.devices()[0].device_kind.lower()
    except Exception:
        return 2
    # Single-TensorCore-per-device generations: v2/v3/v5e/v6e.  Everything
    # else (v4/v5p/v7x/unknown) defaults to 2 -- on a single-core part the
    # size-2 leading axis is just a short sequential loop, so defaulting high
    # is essentially free, while getting it right on v7x is ~2x.
    if ("v2" in kind) or ("v3" in kind) or ("v5 lite" in kind) or ("v5e" in kind) or ("v6" in kind):
        return 1
    return 2


def _scaled_mse_kernel(x_ref, t_ref, o_sq_ref, o_abs_ref,
                       acc_sq_ref, acc_abs_ref, *, rows, block_rows, steps):
    """Accumulates per-lane partial sums of diff^2 and |diff| for one core.

    acc_sq_ref / acc_abs_ref: (1, 128) f32 VMEM partial-sum accumulators.
    o_sq_ref / o_abs_ref:     (1, 1, 128) f32 output blocks (one per core),
                              written once in the epilogue.
    """
    i = pl.program_id(1)

    @pl.when(i == 0)
    def _init():
        acc_sq_ref[...] = jnp.zeros_like(acc_sq_ref)
        acc_abs_ref[...] = jnp.zeros_like(acc_abs_ref)

    # Logical (unclamped) block index covered by this step.  Only the partial
    # last block and clamped duplicate blocks on the second core can contain
    # rows >= `rows`; every other block takes the unmasked fast path so
    # interior blocks stay purely HBM-bound (no iota/compare/select per step).
    blk = pl.program_id(0) * steps + i
    needs_mask = (blk + 1) * block_rows > rows

    @pl.when(jnp.logical_not(needs_mask))
    def _interior():
        diff = x_ref[...].astype(jnp.float32) - t_ref[...].astype(jnp.float32)
        a = jnp.abs(diff)
        acc_sq_ref[...] += jnp.sum(a * a, axis=0, keepdims=True)
        acc_abs_ref[...] += jnp.sum(a, axis=0, keepdims=True)

    @pl.when(needs_mask)
    def _edge():
        # Rows past `rows` (pipeline padding of the last partial block, or a
        # clamped duplicate block) are zeroed so they contribute nothing.
        row_ids = blk * block_rows + jax.lax.broadcasted_iota(
            jnp.int32, (block_rows, _LANES), 0)
        valid = row_ids < rows
        diff = x_ref[...].astype(jnp.float32) - t_ref[...].astype(jnp.float32)
        a = jnp.where(valid, jnp.abs(diff), 0.0)
        acc_sq_ref[...] += jnp.sum(a * a, axis=0, keepdims=True)
        acc_abs_ref[...] += jnp.sum(a, axis=0, keepdims=True)

    @pl.when(i == steps - 1)
    def _finalize():
        o_sq_ref[...] = acc_sq_ref[...].reshape(o_sq_ref.shape)
        o_abs_ref[...] = acc_abs_ref[...].reshape(o_abs_ref.shape)


def scaled_mse_loss(inp, tgt, eps=1e-8, max_block_rows=None):
    """Pallas TPU implementation of ScaledMSELoss.forward."""
    assert inp.shape == tgt.shape, "input / target shape mismatch"

    n = int(inp.size)
    if n == 0:
        return jnp.float32(0.0)

    itemsize = jnp.dtype(inp.dtype).itemsize
    x = inp.reshape(-1)
    t = tgt.reshape(-1)

    # Lane-dense (rows, 128) view.  The reshape is free when n % 128 == 0;
    # otherwise a <128-element tail pad makes it legal (padded zeros contribute
    # 0 to both sums).  The pad is one extra HBM pass for ragged sizes only.
    pad = (-n) % _LANES
    if pad:
        x = jnp.pad(x, (0, pad))
        t = jnp.pad(t, (0, pad))
    rows = (n + pad) // _LANES
    x2 = x.reshape(rows, _LANES)
    t2 = t.reshape(rows, _LANES)

    # Dtype-aware block size from the VMEM byte budget.
    bytes_per_row = _LANES * (4 * itemsize + 24)   # pipeline bufs + f32 temps
    auto_rows = max(_SUBLANES,
                    _round_down(_VMEM_DATA_BUDGET // bytes_per_row, _SUBLANES))
    if max_block_rows is not None:
        auto_rows = max(_SUBLANES,
                        min(auto_rows, _round_down(int(max_block_rows), _SUBLANES)))

    num_cores = _tensorcores_per_device()
    if rows <= auto_rows:
        block_rows = rows            # tiny / medium input: one full-extent block
        num_splits = 1
    else:
        num_splits = num_cores       # 2-way TensorCore split on megacore parts
        block_rows = min(auto_rows, _round_up(pl.cdiv(rows, num_splits), _SUBLANES))
    total_blocks = pl.cdiv(rows, block_rows)
    if total_blocks < num_splits:
        num_splits = 1
    steps = pl.cdiv(total_blocks, num_splits)

    def in_map(c, i):
        # Clamp so a core never addresses a block past the array; the in-kernel
        # mask (computed from the *unclamped* index) zeroes its contribution,
        # and consecutive identical indices are not re-fetched by the pipeline.
        return (jnp.minimum(c * steps + i, total_blocks - 1), 0)

    kernel = functools.partial(
        _scaled_mse_kernel, rows=rows, block_rows=block_rows, steps=steps)

    # Explicit VMEM limit covering 2 inputs x 2 buffers plus elementwise
    # temporaries (actual usage stays well below v7x's 64 MiB physical VMEM).
    in_block_bytes = block_rows * _LANES * itemsize
    f32_block_bytes = block_rows * _LANES * 4
    vmem_limit = int(min(112 << 20,
                         max(16 << 20,
                             4 * in_block_bytes + 6 * f32_block_bytes + (4 << 20))))

    cost = pl.CostEstimate(
        flops=5 * n,
        transcendentals=0,
        bytes_accessed=2 * n * itemsize + 2 * num_splits * _LANES * 4)

    partial_shape = jax.ShapeDtypeStruct((num_splits, 1, _LANES), jnp.float32)
    out_sq, out_abs = pl.pallas_call(
        kernel,
        out_shape=(partial_shape, partial_shape),
        grid_spec=pltpu.PrefetchScalarGridSpec(
            num_scalar_prefetch=0,
            grid=(num_splits, steps),
            in_specs=[
                pl.BlockSpec((block_rows, _LANES), in_map),
                pl.BlockSpec((block_rows, _LANES), in_map),
            ],
            out_specs=[
                pl.BlockSpec((1, 1, _LANES), lambda c, i: (c, 0, 0)),
                pl.BlockSpec((1, 1, _LANES), lambda c, i: (c, 0, 0)),
            ],
            scratch_shapes=[
                pltpu.VMEM((1, _LANES), jnp.float32),
                pltpu.VMEM((1, _LANES), jnp.float32),
            ],
        ),
        compiler_params=pltpu.CompilerParams(
            dimension_semantics=("parallel", "arbitrary"),
            vmem_limit_bytes=vmem_limit,
        ),
        cost_estimate=cost,
    )(x2, t2)

    # Tiny epilogue: combine per-core, per-lane partials and apply the divide.
    sum_sq = jnp.sum(out_sq)
    sum_abs = jnp.sum(out_abs)
    return sum_sq / (sum_abs + jnp.float32(eps))


def _reference(inp, tgt, eps=1e-8):
    diff = inp.astype(jnp.float32) - tgt.astype(jnp.float32)
    return jnp.sum(diff * diff) / (jnp.sum(jnp.abs(diff)) + eps)


if __name__ == "__main__":
    key = jax.random.PRNGKey(0)

    test_cases = [
        # (shape, dtype, forced max_block_rows)
        ((2, 4, 16, 16),    jnp.float32,  None),   # NCHW feature map, single block
        ((1, 3, 11, 7),     jnp.float32,  None),   # ragged tail (n % 128 != 0)
        ((1, 16, 200, 200), jnp.float32,  None),   # larger, single big block
        ((1, 16, 200, 200), jnp.float32,  512),    # multi-block + split + edge mask
        ((1, 16, 200, 200), jnp.float32,  1024),   # odd block count -> clamped duplicate
        ((2, 4, 16, 16),    jnp.bfloat16, None),   # low-precision input, in-kernel upcast
    ]
    for idx, (shape, dtype, mbr) in enumerate(test_cases):
        k1, k2 = jax.random.split(jax.random.fold_in(key, idx))
        x = jax.random.normal(k1, shape, dtype=jnp.float32).astype(dtype)
        t = jax.random.normal(k2, shape, dtype=jnp.float32).astype(dtype)

        loss = jax.block_until_ready(scaled_mse_loss(x, t, eps=1e-8, max_block_rows=mbr))
        ref = _reference(x, t, eps=1e-8)
        assert jnp.allclose(loss, ref, rtol=1e-4, atol=1e-6), (shape, dtype, mbr, loss, ref)

    print("KERNEL_OK")
</pallas_src>

<mosaic_0001>
module attributes {stable_mosaic.version = 11 : i64} {
  func.func @_scaled_mse_kernel(%arg0: i32, %arg1: i32, %arg2: memref<16x128xf32, #tpu.memory_space<vmem>>, %arg3: memref<16x128xf32, #tpu.memory_space<vmem>>, %arg4: memref<1x1x128xf32, #tpu.memory_space<vmem>>, %arg5: memref<1x1x128xf32, #tpu.memory_space<vmem>>, %arg6: memref<1x128xf32, #tpu.memory_space<vmem>>, %arg7: memref<1x128xf32, #tpu.memory_space<vmem>>) attributes {dimension_semantics = [#tpu.dimension_semantics<parallel>, #tpu.dimension_semantics<arbitrary>], iteration_bounds = array<i64: 1, 1>, scalar_prefetch = 0 : i64, scratch_operands = 2 : i64, tpu.core_type = #tpu.core_type<tc>, window_params = [{transform_indices = @transform_0, window_bounds = array<i64: 16, 128>}, {transform_indices = @transform_1, window_bounds = array<i64: 16, 128>}, {transform_indices = @transform_2, window_bounds = array<i64: 1, 1, 128>}, {transform_indices = @transform_3, window_bounds = array<i64: 1, 1, 128>}]} {
    %c0_i32 = arith.constant 0 : i32
    %0 = arith.cmpi eq, %arg1, %c0_i32 : i32
    %1 = arith.extui %0 : i1 to i32
    %c0_i32_0 = arith.constant 0 : i32
    %2 = arith.cmpi ne, %1, %c0_i32_0 : i32
    scf.if %2 {
      %cst = arith.constant 0.000000e+00 : f32
      %16 = vector.broadcast %cst : f32 to vector<1x128xf32>
      %c0 = arith.constant 0 : index
      %c0_7 = arith.constant 0 : index
      %17 = vector.load %arg6[%c0, %c0_7] : memref<1x128xf32, #tpu.memory_space<vmem>>, vector<1x128xf32>
      tpu.vector_store %arg6[%c0, %c0_7], %16 {strides = array<i32>} : memref<1x128xf32, #tpu.memory_space<vmem>>, vector<1x128xf32>,
      %cst_8 = arith.constant 0.000000e+00 : f32
      %18 = vector.broadcast %cst_8 : f32 to vector<1x128xf32>
      %c0_9 = arith.constant 0 : index
      %c0_10 = arith.constant 0 : index
      %19 = vector.load %arg7[%c0_9, %c0_10] : memref<1x128xf32, #tpu.memory_space<vmem>>, vector<1x128xf32>
      tpu.vector_store %arg7[%c0_9, %c0_10], %18 {strides = array<i32>} : memref<1x128xf32, #tpu.memory_space<vmem>>, vector<1x128xf32>,
    } else {
    }
    %c1_i32 = arith.constant 1 : i32
    %3 = arith.muli %arg0, %c1_i32 : i32
    %4 = arith.addi %3, %arg1 : i32
    %c1_i32_1 = arith.constant 1 : i32
    %5 = arith.addi %4, %c1_i32_1 : i32
    %c16_i32 = arith.constant 16 : i32
    %6 = arith.muli %5, %c16_i32 : i32
    %c16_i32_2 = arith.constant 16 : i32
    %7 = arith.cmpi sgt, %6, %c16_i32_2 : i32
    %true = arith.constant true
    %8 = arith.xori %7, %true : i1
    %9 = arith.extui %8 : i1 to i32
    %c0_i32_3 = arith.constant 0 : i32
    %10 = arith.cmpi ne, %9, %c0_i32_3 : i32
    scf.if %10 {
      %c0 = arith.constant 0 : index
      %c0_7 = arith.constant 0 : index
      %16 = vector.load %arg2[%c0, %c0_7] : memref<16x128xf32, #tpu.memory_space<vmem>>, vector<16x128xf32>
      %c0_8 = arith.constant 0 : index
      %c0_9 = arith.constant 0 : index
      %17 = vector.load %arg3[%c0_8, %c0_9] : memref<16x128xf32, #tpu.memory_space<vmem>>, vector<16x128xf32>
      %18 = arith.subf %16, %17 : vector<16x128xf32>
      %19 = math.absf %18 : vector<16x128xf32>
      %c0_10 = arith.constant 0 : index
      %c0_11 = arith.constant 0 : index
      %20 = vector.load %arg6[%c0_10, %c0_11] : memref<1x128xf32, #tpu.memory_space<vmem>>, vector<1x128xf32>
      %21 = arith.mulf %19, %19 : vector<16x128xf32>
      %cst = arith.constant dense<0.000000e+00> : vector<128xf32>
      %22 = vector.multi_reduction <add>, %21, %cst [0] : vector<16x128xf32> to vector<128xf32>
      %23 = vector.shape_cast %22 : vector<128xf32> to vector<1x128xf32>
      %24 = arith.addf %20, %23 : vector<1x128xf32>
      %c0_12 = arith.constant 0 : index
      %c0_13 = arith.constant 0 : index
      %25 = vector.load %arg6[%c0_12, %c0_13] : memref<1x128xf32, #tpu.memory_space<vmem>>, vector<1x128xf32>
      tpu.vector_store %arg6[%c0_12, %c0_13], %24 {strides = array<i32>} : memref<1x128xf32, #tpu.memory_space<vmem>>, vector<1x128xf32>,
      %c0_14 = arith.constant 0 : index
      %c0_15 = arith.constant 0 : index
      %26 = vector.load %arg7[%c0_14, %c0_15] : memref<1x128xf32, #tpu.memory_space<vmem>>, vector<1x128xf32>
      %cst_16 = arith.constant dense<0.000000e+00> : vector<128xf32>
      %27 = vector.multi_reduction <add>, %19, %cst_16 [0] : vector<16x128xf32> to vector<128xf32>
      %28 = vector.shape_cast %27 : vector<128xf32> to vector<1x128xf32>
      %29 = arith.addf %26, %28 : vector<1x128xf32>
      %c0_17 = arith.constant 0 : index
      %c0_18 = arith.constant 0 : index
      %30 = vector.load %arg7[%c0_17, %c0_18] : memref<1x128xf32, #tpu.memory_space<vmem>>, vector<1x128xf32>
      tpu.vector_store %arg7[%c0_17, %c0_18], %29 {strides = array<i32>} : memref<1x128xf32, #tpu.memory_space<vmem>>, vector<1x128xf32>,
    } else {
    }
    %11 = arith.extui %7 : i1 to i32
    %c0_i32_4 = arith.constant 0 : i32
    %12 = arith.cmpi ne, %11, %c0_i32_4 : i32
    scf.if %12 {
      %c16_i32_7 = arith.constant 16 : i32
      %16 = arith.muli %4, %c16_i32_7 : i32
      %17 = tpu.iota {dimensions = array<i32: 0>} : vector<16x128xi32>
      %18 = vector.broadcast %16 : i32 to vector<16x128xi32>
      %19 = arith.addi %18, %17 : vector<16x128xi32>
      %c16_i32_8 = arith.constant 16 : i32
      %20 = vector.broadcast %c16_i32_8 : i32 to vector<16x128xi32>
      %21 = arith.cmpi slt, %19, %20 : vector<16x128xi32>
      %c0 = arith.constant 0 : index
      %c0_9 = arith.constant 0 : index
      %22 = vector.load %arg2[%c0, %c0_9] : memref<16x128xf32, #tpu.memory_space<vmem>>, vector<16x128xf32>
      %c0_10 = arith.constant 0 : index
      %c0_11 = arith.constant 0 : index
      %23 = vector.load %arg3[%c0_10, %c0_11] : memref<16x128xf32, #tpu.memory_space<vmem>>, vector<16x128xf32>
      %24 = arith.subf %22, %23 : vector<16x128xf32>
      %25 = math.absf %24 : vector<16x128xf32>
      %cst = arith.constant 0.000000e+00 : f32
      %26 = vector.broadcast %cst : f32 to vector<16x128xf32>
      %27 = arith.select %21, %25, %26 : vector<16x128xi1>, vector<16x128xf32>
      %c0_12 = arith.constant 0 : index
      %c0_13 = arith.constant 0 : index
      %28 = vector.load %arg6[%c0_12, %c0_13] : memref<1x128xf32, #tpu.memory_space<vmem>>, vector<1x128xf32>
      %29 = arith.mulf %27, %27 : vector<16x128xf32>
      %cst_14 = arith.constant dense<0.000000e+00> : vector<128xf32>
      %30 = vector.multi_reduction <add>, %29, %cst_14 [0] : vector<16x128xf32> to vector<128xf32>
      %31 = vector.shape_cast %30 : vector<128xf32> to vector<1x128xf32>
      %32 = arith.addf %28, %31 : vector<1x128xf32>
      %c0_15 = arith.constant 0 : index
      %c0_16 = arith.constant 0 : index
      %33 = vector.load %arg6[%c0_15, %c0_16] : memref<1x128xf32, #tpu.memory_space<vmem>>, vector<1x128xf32>
      tpu.vector_store %arg6[%c0_15, %c0_16], %32 {strides = array<i32>} : memref<1x128xf32, #tpu.memory_space<vmem>>, vector<1x128xf32>,
      %c0_17 = arith.constant 0 : index
      %c0_18 = arith.constant 0 : index
      %34 = vector.load %arg7[%c0_17, %c0_18] : memref<1x128xf32, #tpu.memory_space<vmem>>, vector<1x128xf32>
      %cst_19 = arith.constant dense<0.000000e+00> : vector<128xf32>
      %35 = vector.multi_reduction <add>, %27, %cst_19 [0] : vector<16x128xf32> to vector<128xf32>
      %36 = vector.shape_cast %35 : vector<128xf32> to vector<1x128xf32>
      %37 = arith.addf %34, %36 : vector<1x128xf32>
      %c0_20 = arith.constant 0 : index
      %c0_21 = arith.constant 0 : index
      %38 = vector.load %arg7[%c0_20, %c0_21] : memref<1x128xf32, #tpu.memory_space<vmem>>, vector<1x128xf32>
      tpu.vector_store %arg7[%c0_20, %c0_21], %37 {strides = array<i32>} : memref<1x128xf32, #tpu.memory_space<vmem>>, vector<1x128xf32>,
    } else {
    }
    %c0_i32_5 = arith.constant 0 : i32
    %13 = arith.cmpi eq, %arg1, %c0_i32_5 : i32
    %14 = arith.extui %13 : i1 to i32
    %c0_i32_6 = arith.constant 0 : i32
    %15 = arith.cmpi ne, %14, %c0_i32_6 : i32
    scf.if %15 {
      %c0 = arith.constant 0 : index
      %c0_7 = arith.constant 0 : index
      %16 = vector.load %arg6[%c0, %c0_7] : memref<1x128xf32, #tpu.memory_space<vmem>>, vector<1x128xf32>
      %17 = vector.shape_cast %16 : vector<1x128xf32> to vector<1x1x128xf32>
      %c0_8 = arith.constant 0 : index
      %c0_9 = arith.constant 0 : index
      %c0_10 = arith.constant 0 : index
      %18 = vector.load %arg4[%c0_8, %c0_9, %c0_10] : memref<1x1x128xf32, #tpu.memory_space<vmem>>, vector<1x1x128xf32>
      tpu.vector_store %arg4[%c0_8, %c0_9, %c0_10], %17 {strides = array<i32>} : memref<1x1x128xf32, #tpu.memory_space<vmem>>, vector<1x1x128xf32>,
      %c0_11 = arith.constant 0 : index
      %c0_12 = arith.constant 0 : index
      %19 = vector.load %arg7[%c0_11, %c0_12] : memref<1x128xf32, #tpu.memory_space<vmem>>, vector<1x128xf32>
      %20 = vector.shape_cast %19 : vector<1x128xf32> to vector<1x1x128xf32>
      %c0_13 = arith.constant 0 : index
      %c0_14 = arith.constant 0 : index
      %c0_15 = arith.constant 0 : index
      %21 = vector.load %arg5[%c0_13, %c0_14, %c0_15] : memref<1x1x128xf32, #tpu.memory_space<vmem>>, vector<1x1x128xf32>
      tpu.vector_store %arg5[%c0_13, %c0_14, %c0_15], %20 {strides = array<i32>} : memref<1x1x128xf32, #tpu.memory_space<vmem>>, vector<1x1x128xf32>,
    } else {
    }
    return
  }
  func.func @transform_0(%arg0: i32, %arg1: i32) -> (i32, i32) {
    %c1_i32 = arith.constant 1 : i32
    %0 = arith.muli %arg0, %c1_i32 : i32
    %1 = arith.addi %0, %arg1 : i32
    %c0_i32 = arith.constant 0 : i32
    %2 = arith.minsi %1, %c0_i32 : i32
    %c0_i32_0 = arith.constant 0 : i32
    %c0_i32_1 = arith.constant 0 : i32
    return %2, %c0_i32_0 : i32, i32
  }
  func.func @transform_1(%arg0: i32, %arg1: i32) -> (i32, i32) {
    %c1_i32 = arith.constant 1 : i32
    %0 = arith.muli %arg0, %c1_i32 : i32
    %1 = arith.addi %0, %arg1 : i32
    %c0_i32 = arith.constant 0 : i32
    %2 = arith.minsi %1, %c0_i32 : i32
    %c0_i32_0 = arith.constant 0 : i32
    %c0_i32_1 = arith.constant 0 : i32
    return %2, %c0_i32_0 : i32, i32
  }
  func.func @transform_2(%arg0: i32, %arg1: i32) -> (i32, i32, i32) {
    %c0_i32 = arith.constant 0 : i32
    %c0_i32_0 = arith.constant 0 : i32
    %c0_i32_1 = arith.constant 0 : i32
    return %arg0, %c0_i32, %c0_i32_0 : i32, i32, i32
  }
  func.func @transform_3(%arg0: i32, %arg1: i32) -> (i32, i32, i32) {
    %c0_i32 = arith.constant 0 : i32
    %c0_i32_0 = arith.constant 0 : i32
    %c0_i32_1 = arith.constant 0 : i32
    return %arg0, %c0_i32, %c0_i32_0 : i32, i32, i32
  }
}

</mosaic_0001>

<llo_original>
// kernel: tpu_custom_call.1
$region0: #{tpu_custom_call.1}
  #allocation0 [shape = 'u32[]', space=smem, size = 0x4, offset = 0x4, fixed_abs, tag = 'smem constant byte address 0x4 - core index']
  #allocation1 [shape = 'u32[144,128]{1,0:T(1,128)}', space=vmem, size = 0x12000, scoped, tag = 'internal scratch']
  #allocation2 [shape = 'f32[1,128]{1,0:T(1,128)}', space=vmem, size = 0x200, scoped, tag = 'scratch operand']
  #allocation3 [shape = 'f32[1,128]{1,0:T(1,128)}', space=vmem, size = 0x200, scoped, tag = 'scratch operand']
  %s0 = inlined_call_operand.hbm [shape: f32[16,128], index: 0, kind: input, shape index: {}]
  %s1 = inlined_call_operand.hbm [shape: f32[16,128], index: 1, kind: input, shape index: {}]
  %s2 = inlined_call_operand.hbm [shape: f32[1,1,128], index: 2, kind: output, shape index: {0}]
  %s3 = inlined_call_operand.hbm [shape: f32[1,1,128], index: 3, kind: output, shape index: {1}]
  %4 = xla_tuple %s2, %s3
  %s5 = sld [smem:[#allocation0]]
  $region50: #{tpu_custom_call.1} parent=0
    _
  %s7 = ssub.s32 1, %s5
  %s8 = scalar_select 0, %s7, %s5
  $region1: #{tpu_custom_call.1} parent=0
    #allocation4 [shape = 'u8[8192]{0}', space=vmem, size = 0x2000, scoped, tag = 'input window, operand 0, single buffered']
    #allocation5 [shape = 's32[1]{0}', space=sflag, size = 0x4, scoped, tag = 'scoped memory for tpu_custom_call.1']
    #allocation6 [shape = 's32[1]{0}', space=sflag, size = 0x4, scoped, tag = 'scoped memory for tpu_custom_call.1']
    #allocation7 [shape = 'u8[8192]{0}', space=vmem, size = 0x2000, scoped, tag = 'input window, operand 1, single buffered']
    #allocation8 [shape = 's32[1]{0}', space=sflag, size = 0x4, scoped, tag = 'scoped memory for tpu_custom_call.1']
    #allocation9 [shape = 'u8[512]{0}', space=vmem, size = 0x400, scoped, tag = 'output window, operand 0, single buffered']
    #allocation10 [shape = 'u8[512]{0}', space=vmem, size = 0x400, scoped, tag = 'output window, operand 1, single buffered']
    #allocation11 [shape = 's32[1]{0}', space=sflag, size = 0x4, scoped, tag = 'scoped memory for tpu_custom_call.1']
    %9 = vsyncpa [#allocation5], 0
    %10 = vsyncpa [#allocation8], 0
    %11 = vsyncpa [#allocation6], 0
    %12 = vsyncpa [#allocation11], 0
    // Predicated region
    $region2: #{tpu_custom_call.1} parent=1 // pred_check
      _
    $region3: #{tpu_custom_call.1} parent=1 // pred_check_branch
      %14 = sbr.rel (0) target = $region5
    $region4: #{tpu_custom_call.1} parent=1 // pred_region
      %s15 = sadd.s32 0, 0
      %p16 = scmp.lt.s32.totalorder %s15, 0
      %s17 = scalar_select %p16, %s15, 0
      %s18 = smul.u32 2, %s17
      %s20 = ssub.s32 256, 256
      %21 = vsyncadd [#allocation5], %s20
      %s22 = smul.addr %s18, 128
      %s23 = scalar_lea.hbm %s0, %s22
      %s24 = sshll.u32 [#allocation4], 4
      %s25 = int_to_ptr.vmem [resolvable:$true] %s24
      %30 = dma.hbm_to_vmem [thread:$0]  %s23, 256, %s25, [#allocation5], 128, 128, 8
    $region5: #{tpu_custom_call.1} parent=1 // pred_fallthru
      _
    // Predicated region
    $region6: #{tpu_custom_call.1} parent=1 // pred_check
      _
    $region7: #{tpu_custom_call.1} parent=1 // pred_check_branch
      %32 = sbr.rel (0) target = $region9
    $region8: #{tpu_custom_call.1} parent=1 // pred_region
      %s33 = sadd.s32 0, 0
      %p34 = scmp.lt.s32.totalorder %s33, 0
      %s35 = scalar_select %p34, %s33, 0
      %s36 = smul.u32 2, %s35
      %s38 = ssub.s32 256, 256
      %39 = vsyncadd [#allocation8], %s38
      %s40 = smul.addr %s36, 128
      %s41 = scalar_lea.hbm %s1, %s40
      %s42 = sshll.u32 [#allocation7], 4
      %s43 = int_to_ptr.vmem [resolvable:$true] %s42
      %48 = dma.hbm_to_vmem [thread:$0]  %s41, 256, %s43, [#allocation8], 128, 128, 8
    $region9: #{tpu_custom_call.1} parent=1 // pred_fallthru
      _
    // Predicated region
    $region10: #{tpu_custom_call.1} parent=1 // pred_check
      _
    $region11: #{tpu_custom_call.1} parent=1 // pred_check_branch
      %50 = sbr.rel (0) target = $region13
    $region12: #{tpu_custom_call.1} parent=1 // pred_region
      %51 = dma.done [#allocation5], 256
    $region13: #{tpu_custom_call.1} parent=1 // pred_fallthru
      _
    // Predicated region
    $region14: #{tpu_custom_call.1} parent=1 // pred_check
      _
    $region15: #{tpu_custom_call.1} parent=1 // pred_check_branch
      %53 = sbr.rel (0) target = $region17
    $region16: #{tpu_custom_call.1} parent=1 // pred_region
      %54 = dma.done [#allocation8], 256
    $region17: #{tpu_custom_call.1} parent=1 // pred_fallthru
      _
    %s55 = sadd.s32 0, 0
    %p56 = scmp.lt.s32.totalorder %s55, 0
    %s57 = scalar_select %p56, %s55, 0
    %s58 = smul.u32 2, %s57
    %s59 = sadd.s32 0, 0
    %p60 = scmp.lt.s32.totalorder %s59, 0
    %s61 = scalar_select %p60, %s59, 0
    %s62 = smul.u32 2, %s61
    %p63 = scmp.eq.s32.totalorder 0, 0
    // Predicated region
    $region18: #{tpu_custom_call.1} parent=1 // pred_check
      %p64 = pneg %p63
    $region19: #{tpu_custom_call.1} parent=1 // pred_check_branch
      %66 = sbr.rel (%p64) target = $region21
    $region20: #{tpu_custom_call.1} parent=1 // pred_region
      %67 = vst [vmem:[#allocation2] sm:$0x1] 0.0
      %68 = vst [vmem:[#allocation3] sm:$0x1] 0.0
    $region21: #{tpu_custom_call.1} parent=1 // pred_fallthru
      _
    %s69 = sadd.s32 0, 0
    %s70 = sadd.s32 %s69, 1
    %s71 = smul.u32 %s70, 16
    %p72 = scmp.gt.s32.totalorder %s71, 16
    %p73 = scmp.le.s32.totalorder %s71, 16
    // Predicated region
    $region22: #{tpu_custom_call.1} parent=1 // pred_check
      %p74 = pneg %p73
    $region23: #{tpu_custom_call.1} parent=1 // pred_check_branch
      %76 = sbr.rel (%p74) target = $region25
    $region24: #{tpu_custom_call.1} parent=1 // pred_region
      %v77 = vld [vmem:[#allocation4] sm:$0xff]
      %v78 = vld [vmem:[#allocation4 + $0x8] sm:$0xff]
      %v79 = vld [vmem:[#allocation7] sm:$0xff]
      %v80 = vld [vmem:[#allocation7 + $0x8] sm:$0xff]
      %v81 = vsub.f32 %v77, %v79
      %v82 = vsub.f32 %v78, %v80
      %v83 = vand.u32 2147483647, %v81
      %v84 = vand.u32 2147483647, %v82
      %v85 = vld [vmem:[#allocation2] sm:$0x1]
      %v86 = vmul.f32 %v83, %v83
      %v87 = vmul.f32 %v84, %v84
      %v88 = vadd.f32 %v86, %v87
      %v89 = vrot.slane %v88, 4
      %v90 = vadd.f32 %v88, %v89
      %v91 = vrot.slane %v90, 2
      %v92 = vadd.f32 %v90, %v91
      %v93 = vrot.slane %v92, 1
      %v94 = vadd.f32 %v92, %v93
      %v95 = vadd.f32 %v85, %v94
      %96 = vst [vmem:[#allocation2] sm:$0x1] %v95
      %v97 = vld [vmem:[#allocation3] sm:$0x1]
      %v98 = vadd.f32 %v83, %v84
      %v99 = vrot.slane %v98, 4
      %v100 = vadd.f32 %v98, %v99
      %v101 = vrot.slane %v100, 2
      %v102 = vadd.f32 %v100, %v101
      %v103 = vrot.slane %v102, 1
      %v104 = vadd.f32 %v102, %v103
      %v105 = vadd.f32 %v97, %v104
      %106 = vst [vmem:[#allocation3] sm:$0x1] %v105
    $region25: #{tpu_custom_call.1} parent=1 // pred_fallthru
      _
    // Predicated region
    $region26: #{tpu_custom_call.1} parent=1 // pred_check
      %p107 = pneg %p72
    $region27: #{tpu_custom_call.1} parent=1 // pred_check_branch
      %109 = sbr.rel (%p107) target = $region29
    $region28: #{tpu_custom_call.1} parent=1 // pred_region
      %s110 = smul.u32 %s69, 16
      %v111 = vlaneseq
      %v112 = vshrl.u32 %v111, 7
      %v113 = vadd.s32 %v112, 8
      %v114 = vstv %s110
      %v115 = vadd.s32 %v114, %v112
      %v116 = vadd.s32 %v114, %v113
      %vm117 = vcmp.lt.s32.totalorder %v115, 16
      %vm118 = vcmp.lt.s32.totalorder %v116, 16
      %v119 = vld [vmem:[#allocation4] sm:$0xff]
      %v120 = vld [vmem:[#allocation4 + $0x8] sm:$0xff]
      %v121 = vld [vmem:[#allocation7] sm:$0xff]
      %v122 = vld [vmem:[#allocation7 + $0x8] sm:$0xff]
      %v123 = vsub.f32 %v119, %v121
      %v124 = vsub.f32 %v120, %v122
      %v125 = vand.u32 2147483647, %v123
      %v126 = vand.u32 2147483647, %v124
      %v127 = vsel %vm117, %v125, 0.0
      %v128 = vsel %vm118, %v126, 0.0
      %v129 = vld [vmem:[#allocation2] sm:$0x1]
      %v130 = vmul.f32 %v127, %v127
      %v131 = vmul.f32 %v128, %v128
      %v132 = vadd.f32 %v130, %v131
      %v133 = vrot.slane %v132, 4
      %v134 = vadd.f32 %v132, %v133
      %v135 = vrot.slane %v134, 2
      %v136 = vadd.f32 %v134, %v135
      %v137 = vrot.slane %v136, 1
      %v138 = vadd.f32 %v136, %v137
      %v139 = vadd.f32 %v129, %v138
      %140 = vst [vmem:[#allocation2] sm:$0x1] %v139
      %v141 = vld [vmem:[#allocation3] sm:$0x1]
      %v142 = vadd.f32 %v127, %v128
      %v143 = vrot.slane %v142, 4
      %v144 = vadd.f32 %v142, %v143
      %v145 = vrot.slane %v144, 2
      %v146 = vadd.f32 %v144, %v145
      %v147 = vrot.slane %v146, 1
      %v148 = vadd.f32 %v146, %v147
      %v149 = vadd.f32 %v141, %v148
      %150 = vst [vmem:[#allocation3] sm:$0x1] %v149
    $region29: #{tpu_custom_call.1} parent=1 // pred_fallthru
      _
    // Predicated region
    $region30: #{tpu_custom_call.1} parent=1 // pred_check
      %p151 = pneg %p63
    $region31: #{tpu_custom_call.1} parent=1 // pred_check_branch
      %153 = sbr.rel (%p151) target = $region33
    $region32: #{tpu_custom_call.1} parent=1 // pred_region
      %v154 = vld [vmem:[#allocation2] sm:$0x1]
      %155 = vst [vmem:[#allocation9] sm:$0x1] %v154
      %v156 = vld [vmem:[#allocation3] sm:$0x1]
      %157 = vst [vmem:[#allocation10] sm:$0x1] %v156
    $region33: #{tpu_custom_call.1} parent=1 // pred_fallthru
      _
    // Predicated region
    $region34: #{tpu_custom_call.1} parent=1 // pred_check
      _
    $region35: #{tpu_custom_call.1} parent=1 // pred_check_branch
      %159 = sbr.rel (0) target = $region37
    $region36: #{tpu_custom_call.1} parent=1 // pred_region
      %s161 = ssub.s32 16, 16
      %162 = vsyncadd [#allocation6], %s161
      %s164 = sshll.u32 [#allocation9], 4
      %s165 = int_to_ptr.vmem [resolvable:$true] %s164
      %167 = dma.vmem_to_hbm [thread:$0]  %s165, 16, %s2, [#allocation6]
    $region37: #{tpu_custom_call.1} parent=1 // pred_fallthru
      _
    // Predicated region
    $region38: #{tpu_custom_call.1} parent=1 // pred_check
      _
    $region39: #{tpu_custom_call.1} parent=1 // pred_check_branch
      %169 = sbr.rel (0) target = $region41
    $region40: #{tpu_custom_call.1} parent=1 // pred_region
      %s171 = ssub.s32 16, 16
      %172 = vsyncadd [#allocation11], %s171
      %s174 = sshll.u32 [#allocation10], 4
      %s175 = int_to_ptr.vmem [resolvable:$true] %s174
      %177 = dma.vmem_to_hbm [thread:$0]  %s175, 16, %s3, [#allocation11]
    $region41: #{tpu_custom_call.1} parent=1 // pred_fallthru
      _
    // Predicated region
    $region42: #{tpu_custom_call.1} parent=1 // pred_check
      _
    $region43: #{tpu_custom_call.1} parent=1 // pred_check_branch
      %179 = sbr.rel (0) target = $region45
    $region44: #{tpu_custom_call.1} parent=1 // pred_region
      %180 = dma.done [#allocation6], 16
    $region45: #{tpu_custom_call.1} parent=1 // pred_fallthru
      _
    // Predicated region
    $region46: #{tpu_custom_call.1} parent=1 // pred_check
      _
    $region47: #{tpu_custom_call.1} parent=1 // pred_check_branch
      %182 = sbr.rel (0) target = $region49
    $region48: #{tpu_custom_call.1} parent=1 // pred_region
      %183 = dma.done [#allocation11], 16
    $region49: #{tpu_custom_call.1} parent=1 // pred_fallthru
      _
    %184 = vsyncpa [#allocation5], 1
    %185 = vsyncpa [#allocation8], 1
    %186 = vsyncpa [#allocation6], 1
    %187 = vsyncpa [#allocation11], 1

</llo_original>
